<compile_context>
chip_gen: v5e
topology: v5e:2x2
jax: 0.10.0
libtpu: 0.0.40
codegen_flags: <defaults>
</compile_context>

<pallas_src>
import jax
import jax.numpy as jnp
from jax.experimental import pallas as pl
from jax.experimental.pallas import tpu as pltpu

IN_DIM = 3
HIDDEN = 64
OUT_DIM = 28 * 28  # 784


def _round_up(x, m):
    return (x + m - 1) // m * m


def decoder_kernel(x_ref, w1_ref, b1_ref, w2_ref, b2_ref, o_ref):
    x = x_ref[...]                                   # (TB, 3)
    w1 = w1_ref[...]                                 # (3, 64)
    # Layer 1 (K=3): VPU broadcast multiply-adds; keeps the tiny contraction
    # off the MXU, which would be nearly empty at K=3.
    h = (x[:, 0:1] * w1[0:1, :]
         + x[:, 1:2] * w1[1:2, :]
         + x[:, 2:3] * w1[2:3, :]
         + b1_ref[...])                              # (TB, 64)
    h = jnp.maximum(h, 0.0)                          # ReLU
    # Layer 2: MXU matmul straight into the (TB, 784) output tile.
    y = jnp.dot(h, w2_ref[...], preferred_element_type=jnp.float32)
    o_ref[...] = (y + b2_ref[...]).astype(o_ref.dtype)


def decoder_forward(x, w1, b1_2d, w2, b2_2d, *, tb=2048):
    """Decoder forward: x (B, 3) -> (B, 784) float32.

    b1_2d / b2_2d must already be shaped (1, 64) / (1, 784) (done once at
    init time — no per-call weight preprocessing).
    """
    B = x.shape[0]
    b8 = _round_up(B, 8)

    TB = min(tb, b8)                       # batch tile, multiple of 8
    # v7x megacore: ensure >=2 batch tiles when B is large enough, so the
    # "parallel" grid axis actually shards across both TensorCores.
    if b8 >= 16:
        TB = min(TB, max(8, (b8 // 2) // 8 * 8))

    grid = (pl.cdiv(B, TB),)

    cost = pl.CostEstimate(
        flops=2 * B * (IN_DIM * HIDDEN + HIDDEN * OUT_DIM),
        transcendentals=0,
        bytes_accessed=4 * (B * IN_DIM + B * OUT_DIM
                            + IN_DIM * HIDDEN + HIDDEN
                            + HIDDEN * OUT_DIM + OUT_DIM),
    )

    return pl.pallas_call(
        decoder_kernel,
        out_shape=jax.ShapeDtypeStruct((B, OUT_DIM), jnp.float32),
        grid=grid,
        in_specs=[
            pl.BlockSpec((TB, IN_DIM), lambda i: (i, 0)),        # x tile
            # Constant index_maps: fetched once, VMEM-resident thereafter.
            pl.BlockSpec((IN_DIM, HIDDEN), lambda i: (0, 0)),    # w1
            pl.BlockSpec((1, HIDDEN), lambda i: (0, 0)),         # b1
            pl.BlockSpec((HIDDEN, OUT_DIM), lambda i: (0, 0)),   # w2
            pl.BlockSpec((1, OUT_DIM), lambda i: (0, 0)),        # b2
        ],
        out_specs=pl.BlockSpec((TB, OUT_DIM), lambda i: (i, 0)),
        compiler_params=pltpu.CompilerParams(
            dimension_semantics=("parallel",),   # v7x: shard tiles on 2 TCs
            vmem_limit_bytes=32 << 20,           # fits TB=2048 double-buffered
        ),
        cost_estimate=cost,
    )(x, w1, b1_2d, w2, b2_2d)


def init_params(key):
    """Uniform init mimicking torch Linear default (bound = 1/sqrt(fan_in)).
    Weights stored as (in, out); biases pre-shaped to (1, F) so the forward
    pass does no per-call parameter reshaping."""
    k1, k2, k3, k4 = jax.random.split(key, 4)
    bound1 = 1.0 / jnp.sqrt(IN_DIM)
    bound2 = 1.0 / jnp.sqrt(HIDDEN)
    w1 = jax.random.uniform(k1, (IN_DIM, HIDDEN), jnp.float32, -bound1, bound1)
    b1 = jax.random.uniform(k2, (1, HIDDEN), jnp.float32, -bound1, bound1)
    w2 = jax.random.uniform(k3, (HIDDEN, OUT_DIM), jnp.float32, -bound2, bound2)
    b2 = jax.random.uniform(k4, (1, OUT_DIM), jnp.float32, -bound2, bound2)
    return w1, b1, w2, b2


if __name__ == "__main__":
    key = jax.random.PRNGKey(0)
    kx, kp = jax.random.split(key)

    B = 8  # small batch; latent dim is 3 per the module definition
    x = jax.random.normal(kx, (B, IN_DIM), jnp.float32)
    w1, b1, w2, b2 = init_params(kp)

    out = decoder_forward(x, w1, b1, w2, b2)
    out = jax.block_until_ready(out)

    # sanity check against plain-JAX reference (same forward semantics)
    ref = jnp.maximum(x @ w1 + b1, 0.0) @ w2 + b2
    assert out.shape == (B, OUT_DIM), out.shape
    assert jnp.allclose(out, ref, atol=1e-4, rtol=1e-4)

    print("KERNEL_OK")
</pallas_src>

<mosaic_0001>
module attributes {stable_mosaic.version = 11 : i64} {
  func.func @decoder_kernel(%arg0: i32, %arg1: memref<8x3xf32, #tpu.memory_space<vmem>>, %arg2: memref<3x64xf32, #tpu.memory_space<vmem>>, %arg3: memref<1x64xf32, #tpu.memory_space<vmem>>, %arg4: memref<64x784xf32, #tpu.memory_space<vmem>>, %arg5: memref<1x784xf32, #tpu.memory_space<vmem>>, %arg6: memref<8x784xf32, #tpu.memory_space<vmem>>) attributes {dimension_semantics = [#tpu.dimension_semantics<parallel>], iteration_bounds = array<i64: 1>, scalar_prefetch = 0 : i64, scratch_operands = 0 : i64, tpu.core_type = #tpu.core_type<tc>, window_params = [{transform_indices = @transform_0, window_bounds = array<i64: 8, 3>}, {pipeline_mode = #tpu.pipeline_mode<synchronous>, transform_indices = @transform_1, window_bounds = array<i64: 3, 64>}, {pipeline_mode = #tpu.pipeline_mode<synchronous>, transform_indices = @transform_2, window_bounds = array<i64: 1, 64>}, {pipeline_mode = #tpu.pipeline_mode<synchronous>, transform_indices = @transform_3, window_bounds = array<i64: 64, 784>}, {pipeline_mode = #tpu.pipeline_mode<synchronous>, transform_indices = @transform_4, window_bounds = array<i64: 1, 784>}, {transform_indices = @transform_5, window_bounds = array<i64: 8, 784>}]} {
    %c0 = arith.constant 0 : index
    %c0_0 = arith.constant 0 : index
    %0 = vector.load %arg1[%c0, %c0_0] : memref<8x3xf32, #tpu.memory_space<vmem>>, vector<8x3xf32>
    %c0_1 = arith.constant 0 : index
    %c0_2 = arith.constant 0 : index
    %1 = vector.load %arg2[%c0_1, %c0_2] : memref<3x64xf32, #tpu.memory_space<vmem>>, vector<3x64xf32>
    %2 = vector.extract_strided_slice %0 {offsets = [0, 0], sizes = [8, 1], strides = [1, 1]} : vector<8x3xf32> to vector<8x1xf32>
    %3 = vector.extract_strided_slice %1 {offsets = [0, 0], sizes = [1, 64], strides = [1, 1]} : vector<3x64xf32> to vector<1x64xf32>
    %4 = vector.broadcast %2 : vector<8x1xf32> to vector<8x64xf32>
    %5 = vector.broadcast %3 : vector<1x64xf32> to vector<8x64xf32>
    %6 = arith.mulf %4, %5 : vector<8x64xf32>
    %7 = vector.extract_strided_slice %0 {offsets = [0, 1], sizes = [8, 1], strides = [1, 1]} : vector<8x3xf32> to vector<8x1xf32>
    %8 = vector.extract_strided_slice %1 {offsets = [1, 0], sizes = [1, 64], strides = [1, 1]} : vector<3x64xf32> to vector<1x64xf32>
    %9 = vector.broadcast %7 : vector<8x1xf32> to vector<8x64xf32>
    %10 = vector.broadcast %8 : vector<1x64xf32> to vector<8x64xf32>
    %11 = arith.mulf %9, %10 : vector<8x64xf32>
    %12 = arith.addf %6, %11 : vector<8x64xf32>
    %13 = vector.extract_strided_slice %0 {offsets = [0, 2], sizes = [8, 1], strides = [1, 1]} : vector<8x3xf32> to vector<8x1xf32>
    %14 = vector.extract_strided_slice %1 {offsets = [2, 0], sizes = [1, 64], strides = [1, 1]} : vector<3x64xf32> to vector<1x64xf32>
    %15 = vector.broadcast %13 : vector<8x1xf32> to vector<8x64xf32>
    %16 = vector.broadcast %14 : vector<1x64xf32> to vector<8x64xf32>
    %17 = arith.mulf %15, %16 : vector<8x64xf32>
    %18 = arith.addf %12, %17 : vector<8x64xf32>
    %c0_3 = arith.constant 0 : index
    %c0_4 = arith.constant 0 : index
    %19 = vector.load %arg3[%c0_3, %c0_4] : memref<1x64xf32, #tpu.memory_space<vmem>>, vector<1x64xf32>
    %20 = vector.broadcast %19 : vector<1x64xf32> to vector<8x64xf32>
    %21 = arith.addf %18, %20 : vector<8x64xf32>
    %cst = arith.constant 0.000000e+00 : f32
    %22 = vector.broadcast %cst : f32 to vector<8x64xf32>
    %23 = arith.maximumf %21, %22 : vector<8x64xf32>
    %c0_5 = arith.constant 0 : index
    %c0_6 = arith.constant 0 : index
    %24 = vector.load %arg4[%c0_5, %c0_6] : memref<64x784xf32, #tpu.memory_space<vmem>>, vector<64x784xf32>
    %cst_7 = arith.constant dense<0.000000e+00> : vector<8x784xf32>
    %25 = tpu.matmul %23, %24, %cst_7 {dimension_numbers = #tpu.dot_dimension_numbers<[1], [0], [0], [1], [0, 0, 1, 1], [], []>} : vector<8x64xf32>, vector<64x784xf32>, vector<8x784xf32> -> vector<8x784xf32>
    %c0_8 = arith.constant 0 : index
    %c0_9 = arith.constant 0 : index
    %26 = vector.load %arg5[%c0_8, %c0_9] : memref<1x784xf32, #tpu.memory_space<vmem>>, vector<1x784xf32>
    %27 = vector.broadcast %26 : vector<1x784xf32> to vector<8x784xf32>
    %28 = arith.addf %25, %27 : vector<8x784xf32>
    %c0_10 = arith.constant 0 : index
    %c0_11 = arith.constant 0 : index
    %29 = vector.load %arg6[%c0_10, %c0_11] : memref<8x784xf32, #tpu.memory_space<vmem>>, vector<8x784xf32>
    tpu.vector_store %arg6[%c0_10, %c0_11], %28 {strides = array<i32>} : memref<8x784xf32, #tpu.memory_space<vmem>>, vector<8x784xf32>,
    return
  }
  func.func @transform_0(%arg0: i32) -> (i32, i32) {
    %c0_i32 = arith.constant 0 : i32
    %c0_i32_0 = arith.constant 0 : i32
    return %arg0, %c0_i32 : i32, i32
  }
  func.func @transform_1(%arg0: i32) -> (i32, i32) {
    %c0_i32 = arith.constant 0 : i32
    %c0_i32_0 = arith.constant 0 : i32
    %c0_i32_1 = arith.constant 0 : i32
    return %c0_i32, %c0_i32_0 : i32, i32
  }
  func.func @transform_2(%arg0: i32) -> (i32, i32) {
    %c0_i32 = arith.constant 0 : i32
    %c0_i32_0 = arith.constant 0 : i32
    %c0_i32_1 = arith.constant 0 : i32
    return %c0_i32, %c0_i32_0 : i32, i32
  }
  func.func @transform_3(%arg0: i32) -> (i32, i32) {
    %c0_i32 = arith.constant 0 : i32
    %c0_i32_0 = arith.constant 0 : i32
    %c0_i32_1 = arith.constant 0 : i32
    return %c0_i32, %c0_i32_0 : i32, i32
  }
  func.func @transform_4(%arg0: i32) -> (i32, i32) {
    %c0_i32 = arith.constant 0 : i32
    %c0_i32_0 = arith.constant 0 : i32
    %c0_i32_1 = arith.constant 0 : i32
    return %c0_i32, %c0_i32_0 : i32, i32
  }
  func.func @transform_5(%arg0: i32) -> (i32, i32) {
    %c0_i32 = arith.constant 0 : i32
    %c0_i32_0 = arith.constant 0 : i32
    return %arg0, %c0_i32 : i32, i32
  }
}

</mosaic_0001>

<llo_original>
// kernel: tpu_custom_call.1
$region0: #{tpu_custom_call.1}
  #allocation0 [shape = 'u32[]', space=smem, size = 0x4, offset = 0x4, fixed_abs, tag = 'smem constant byte address 0x4 - core index']
  #allocation1 [shape = 'u32[72,128]{1,0:T(1,128)}', space=vmem, size = 0x9000, scoped, tag = 'internal scratch']
  %s0 = inlined_call_operand.vmem [shape: f32[8,3], index: 0, kind: input, shape index: {}]
  %s1 = inlined_call_operand.vmem [shape: f32[3,64], index: 1, kind: input, shape index: {}]
  %s2 = inlined_call_operand.vmem [shape: f32[1,64], index: 2, kind: input, shape index: {}]
  %s3 = inlined_call_operand.hbm [shape: f32[64,784], index: 3, kind: input, shape index: {}]
  %s4 = inlined_call_operand.vmem [shape: f32[1,784], index: 4, kind: input, shape index: {}]
  %s5 = inlined_call_operand.hbm [shape: f32[8,784], index: 5, kind: output, shape index: {}]
  %s6 = sld [smem:[#allocation0]]
  $region34: #{tpu_custom_call.1} parent=0
    _
  %s8 = ssub.s32 1, %s6
  %s9 = scalar_select 0, %s8, %s6
  $region1: #{tpu_custom_call.1} parent=0
    #allocation2 [shape = 'u8[229376]{0}', space=vmem, size = 0x38000, scoped, tag = 'input window, operand 3, single buffered']
    #allocation3 [shape = 's32[1]{0}', space=sflag, size = 0x4, scoped, tag = 'scoped memory for tpu_custom_call.1']
    #allocation4 [shape = 's32[1]{0}', space=sflag, size = 0x4, scoped, tag = 'scoped memory for tpu_custom_call.1']
    #allocation5 [shape = 'u8[28672]{0}', space=vmem, size = 0x7000, scoped, tag = 'output window, operand 0, single buffered']
    %10 = vsyncpa [#allocation3], 0
    %11 = vsyncpa [#allocation4], 0
    // Predicated region
    $region2: #{tpu_custom_call.1} parent=1 // pred_check
      _
    $region3: #{tpu_custom_call.1} parent=1 // pred_check_branch
      %13 = sbr.rel (0) target = $region5
    $region4: #{tpu_custom_call.1} parent=1 // pred_region
      _
    $region5: #{tpu_custom_call.1} parent=1 // pred_fallthru
      _
    // Predicated region
    $region6: #{tpu_custom_call.1} parent=1 // pred_check
      _
    $region7: #{tpu_custom_call.1} parent=1 // pred_check_branch
      %15 = sbr.rel (0) target = $region9
    $region8: #{tpu_custom_call.1} parent=1 // pred_region
      _
    $region9: #{tpu_custom_call.1} parent=1 // pred_fallthru
      _
    // Predicated region
    $region10: #{tpu_custom_call.1} parent=1 // pred_check
      _
    $region11: #{tpu_custom_call.1} parent=1 // pred_check_branch
      %17 = sbr.rel (0) target = $region13
    $region12: #{tpu_custom_call.1} parent=1 // pred_region
      _
    $region13: #{tpu_custom_call.1} parent=1 // pred_fallthru
      _
    // Predicated region
    $region14: #{tpu_custom_call.1} parent=1 // pred_check
      _
    $region15: #{tpu_custom_call.1} parent=1 // pred_check_branch
      %19 = sbr.rel (0) target = $region17
    $region16: #{tpu_custom_call.1} parent=1 // pred_region
      %21 = vsyncadd [#allocation3], 0
      %s22 = sshll.u32 %s3, 4
      %s23 = int_to_ptr.hbm [resolvable:$true] %s22
      %s24 = sshll.u32 [#allocation2], 4
      %s25 = int_to_ptr.vmem [resolvable:$true] %s24
      %30 = dma.hbm_to_vmem [thread:$0]  %s23, 7168, %s25, [#allocation3], 896, 896, 56
    $region17: #{tpu_custom_call.1} parent=1 // pred_fallthru
      _
    // Predicated region
    $region18: #{tpu_custom_call.1} parent=1 // pred_check
      _
    $region19: #{tpu_custom_call.1} parent=1 // pred_check_branch
      %32 = sbr.rel (0) target = $region21
    $region20: #{tpu_custom_call.1} parent=1 // pred_region
      _
    $region21: #{tpu_custom_call.1} parent=1 // pred_fallthru
      _
    // Predicated region
    $region22: #{tpu_custom_call.1} parent=1 // pred_check
      _
    $region23: #{tpu_custom_call.1} parent=1 // pred_check_branch
      %34 = sbr.rel (0) target = $region25
    $region24: #{tpu_custom_call.1} parent=1 // pred_region
      %36 = dma.done [#allocation3], 7168
    $region25: #{tpu_custom_call.1} parent=1 // pred_fallthru
      _
    %v37 = vld [vmem:[%s0] sm:$0xff]
    %v38 = vld [vmem:[%s1] sm:$0x7]
    %40 = vset.pattern.permute.xlu0 0
    %41 = vperm.xlu0 %40, %v37
    %v42 = vpop.permute.xlu0 %41
    %v44 = vperm.slane %v38, 0
    %v45 = vmul.f32 %v42, %v44
    %46 = vset.pattern.permute.xlu0 1
    %47 = vperm.xlu0 %46, %v37
    %v48 = vpop.permute.xlu0 %47
    %v50 = vperm.slane %v38, 1
    %v51 = vmul.f32 %v48, %v50
    %v52 = vadd.f32 %v45, %v51
    %53 = vset.pattern.permute.xlu0 2
    %54 = vperm.xlu0 %53, %v37
    %v55 = vpop.permute.xlu0 %54
    %v57 = vperm.slane %v38, 2
    %v58 = vmul.f32 %v55, %v57
    %v59 = vadd.f32 %v52, %v58
    %v60 = vld [vmem:[%s2] sm:$0x1]
    %v62 = vperm.slane %v60, 0
    %v64 = vadd.f32 %v59, %v62
    %v65 = vmax.f32 %v64, 0.0
    %v66 = vld [vmem:[#allocation2] sm:$0xff]
    %v67 = vld [vmem:[#allocation2 + $0x8] sm:$0xff]
    %v68 = vld [vmem:[#allocation2 + $0x10] sm:$0xff]
    %v69 = vld [vmem:[#allocation2 + $0x18] sm:$0xff]
    %v70 = vld [vmem:[#allocation2 + $0x20] sm:$0xff]
    %v71 = vld [vmem:[#allocation2 + $0x28] sm:$0xff]
    %v72 = vld [vmem:[#allocation2 + $0x30] sm:$0xff]
    %v73 = vld [vmem:[#allocation2 + $0x38] sm:$0xff]
    %v74 = vld [vmem:[#allocation2 + $0x40] sm:$0xff]
    %v75 = vld [vmem:[#allocation2 + $0x48] sm:$0xff]
    %v76 = vld [vmem:[#allocation2 + $0x50] sm:$0xff]
    %v77 = vld [vmem:[#allocation2 + $0x58] sm:$0xff]
    %v78 = vld [vmem:[#allocation2 + $0x60] sm:$0xff]
    %v79 = vld [vmem:[#allocation2 + $0x68] sm:$0xff]
    %v80 = vld [vmem:[#allocation2 + $0x70] sm:$0xff]
    %v81 = vld [vmem:[#allocation2 + $0x78] sm:$0xff]
    %v82 = vld [vmem:[#allocation2 + $0x80] sm:$0xff]
    %v83 = vld [vmem:[#allocation2 + $0x88] sm:$0xff]
    %v84 = vld [vmem:[#allocation2 + $0x90] sm:$0xff]
    %v85 = vld [vmem:[#allocation2 + $0x98] sm:$0xff]
    %v86 = vld [vmem:[#allocation2 + $0xa0] sm:$0xff]
    %v87 = vld [vmem:[#allocation2 + $0xa8] sm:$0xff]
    %v88 = vld [vmem:[#allocation2 + $0xb0] sm:$0xff]
    %v89 = vld [vmem:[#allocation2 + $0xb8] sm:$0xff]
    %v90 = vld [vmem:[#allocation2 + $0xc0] sm:$0xff]
    %v91 = vld [vmem:[#allocation2 + $0xc8] sm:$0xff]
    %v92 = vld [vmem:[#allocation2 + $0xd0] sm:$0xff]
    %v93 = vld [vmem:[#allocation2 + $0xd8] sm:$0xff]
    %v94 = vld [vmem:[#allocation2 + $0xe0] sm:$0xff]
    %v95 = vld [vmem:[#allocation2 + $0xe8] sm:$0xff]
    %v96 = vld [vmem:[#allocation2 + $0xf0] sm:$0xff]
    %v97 = vld [vmem:[#allocation2 + $0xf8] sm:$0xff]
    %v98 = vld [vmem:[#allocation2 + $0x100] sm:$0xff]
    %v99 = vld [vmem:[#allocation2 + $0x108] sm:$0xff]
    %v100 = vld [vmem:[#allocation2 + $0x110] sm:$0xff]
    %v101 = vld [vmem:[#allocation2 + $0x118] sm:$0xff]
    %v102 = vld [vmem:[#allocation2 + $0x120] sm:$0xff]
    %v103 = vld [vmem:[#allocation2 + $0x128] sm:$0xff]
    %v104 = vld [vmem:[#allocation2 + $0x130] sm:$0xff]
    %v105 = vld [vmem:[#allocation2 + $0x138] sm:$0xff]
    %v106 = vld [vmem:[#allocation2 + $0x140] sm:$0xff]
    %v107 = vld [vmem:[#allocation2 + $0x148] sm:$0xff]
    %v108 = vld [vmem:[#allocation2 + $0x150] sm:$0xff]
    %v109 = vld [vmem:[#allocation2 + $0x158] sm:$0xff]
    %v110 = vld [vmem:[#allocation2 + $0x160] sm:$0xff]
    %v111 = vld [vmem:[#allocation2 + $0x168] sm:$0xff]
    %v112 = vld [vmem:[#allocation2 + $0x170] sm:$0xff]
    %v113 = vld [vmem:[#allocation2 + $0x178] sm:$0xff]
    %v114 = vld [vmem:[#allocation2 + $0x180] sm:$0xff]
    %v115 = vld [vmem:[#allocation2 + $0x188] sm:$0xff]
    %v116 = vld [vmem:[#allocation2 + $0x190] sm:$0xff]
    %v117 = vld [vmem:[#allocation2 + $0x198] sm:$0xff]
    %v118 = vld [vmem:[#allocation2 + $0x1a0] sm:$0xff]
    %v119 = vld [vmem:[#allocation2 + $0x1a8] sm:$0xff]
    %v120 = vld [vmem:[#allocation2 + $0x1b0] sm:$0xff]
    %v121 = vld [vmem:[#allocation2 + $0x1b8] sm:$0xff]
    %v122 = vld [vmem:[%s4] sm:$0x7f]
    %v124 = vperm.slane %v122, 0
    %v125 = vperm.slane %v122, 1
    %v126 = vperm.slane %v122, 2
    %v127 = vperm.slane %v122, 3
    %v128 = vperm.slane %v122, 4
    %v129 = vperm.slane %v122, 5
    %v130 = vperm.slane %v122, 6
    %vm138 = vcmask 523264
    %v140 = vsel %vm138, %v65, 0
    %142 = vmatpush.msra.mxu0 0.0
    %143 = vmatpush.msra.mxu0 0.0
    %144 = vmatpush.msra.mxu0 0.0
    %145 = vmatpush.msra.mxu0 0.0
    %146 = vmatpush.msra.mxu0 0.0
    %147 = vmatpush.msra.mxu0 0.0
    %148 = vmatpush.msra.mxu0 0.0
    %149 = vmatpush.msra.mxu0 0.0
    %150 = vmatpush.msra.mxu0 %v115
    %151 = vmatpush.msra.mxu0 %v108
    %152 = vmatpush.msra.mxu0 %v101
    %153 = vmatpush.msra.mxu0 %v94
    %154 = vmatpush.msra.mxu0 %v87
    %155 = vmatpush.msra.mxu0 %v80
    %156 = vmatpush.msra.mxu0 %v73
    %157 = vmatpush.msra.mxu0 %v66
    %158 = vmatmul.f32.gmra.mxu0 %v140
    %v159 = vpop.f32.mrf.mxu0
    %v160 = vadd.f32 %v124, %v159
    %161 = vdwg.mxu0
    %162 = vmatpush.msra.mxu0 0.0
    %163 = vmatpush.msra.mxu0 0.0
    %164 = vmatpush.msra.mxu0 0.0
    %165 = vmatpush.msra.mxu0 0.0
    %166 = vmatpush.msra.mxu0 0.0
    %167 = vmatpush.msra.mxu0 0.0
    %168 = vmatpush.msra.mxu0 0.0
    %169 = vmatpush.msra.mxu0 0.0
    %170 = vmatpush.msra.mxu0 %v116
    %171 = vmatpush.msra.mxu0 %v109
    %172 = vmatpush.msra.mxu0 %v102
    %173 = vmatpush.msra.mxu0 %v95
    %174 = vmatpush.msra.mxu0 %v88
    %175 = vmatpush.msra.mxu0 %v81
    %176 = vmatpush.msra.mxu0 %v74
    %177 = vmatpush.msra.mxu0 %v67
    %178 = vmatmul.f32.gmra.mxu0 %v140
    %v179 = vpop.f32.mrf.mxu0
    %v180 = vadd.f32 %v125, %v179
    %181 = vdwg.mxu0
    %182 = vmatpush.msra.mxu0 0.0
    %183 = vmatpush.msra.mxu0 0.0
    %184 = vmatpush.msra.mxu0 0.0
    %185 = vmatpush.msra.mxu0 0.0
    %186 = vmatpush.msra.mxu0 0.0
    %187 = vmatpush.msra.mxu0 0.0
    %188 = vmatpush.msra.mxu0 0.0
    %189 = vmatpush.msra.mxu0 0.0
    %190 = vmatpush.msra.mxu0 %v117
    %191 = vmatpush.msra.mxu0 %v110
    %192 = vmatpush.msra.mxu0 %v103
    %193 = vmatpush.msra.mxu0 %v96
    %194 = vmatpush.msra.mxu0 %v89
    %195 = vmatpush.msra.mxu0 %v82
    %196 = vmatpush.msra.mxu0 %v75
    %197 = vmatpush.msra.mxu0 %v68
    %198 = vmatmul.f32.gmra.mxu0 %v140
    %v199 = vpop.f32.mrf.mxu0
    %v200 = vadd.f32 %v126, %v199
    %201 = vdwg.mxu0
    %202 = vmatpush.msra.mxu0 0.0
    %203 = vmatpush.msra.mxu0 0.0
    %204 = vmatpush.msra.mxu0 0.0
    %205 = vmatpush.msra.mxu0 0.0
    %206 = vmatpush.msra.mxu0 0.0
    %207 = vmatpush.msra.mxu0 0.0
    %208 = vmatpush.msra.mxu0 0.0
    %209 = vmatpush.msra.mxu0 0.0
    %210 = vmatpush.msra.mxu0 %v118
    %211 = vmatpush.msra.mxu0 %v111
    %212 = vmatpush.msra.mxu0 %v104
    %213 = vmatpush.msra.mxu0 %v97
    %214 = vmatpush.msra.mxu0 %v90
    %215 = vmatpush.msra.mxu0 %v83
    %216 = vmatpush.msra.mxu0 %v76
    %217 = vmatpush.msra.mxu0 %v69
    %218 = vmatmul.f32.gmra.mxu0 %v140
    %v219 = vpop.f32.mrf.mxu0
    %v220 = vadd.f32 %v127, %v219
    %221 = vdwg.mxu0
    %222 = vmatpush.msra.mxu0 0.0
    %223 = vmatpush.msra.mxu0 0.0
    %224 = vmatpush.msra.mxu0 0.0
    %225 = vmatpush.msra.mxu0 0.0
    %226 = vmatpush.msra.mxu0 0.0
    %227 = vmatpush.msra.mxu0 0.0
    %228 = vmatpush.msra.mxu0 0.0
    %229 = vmatpush.msra.mxu0 0.0
    %230 = vmatpush.msra.mxu0 %v119
    %231 = vmatpush.msra.mxu0 %v112
    %232 = vmatpush.msra.mxu0 %v105
    %233 = vmatpush.msra.mxu0 %v98
    %234 = vmatpush.msra.mxu0 %v91
    %235 = vmatpush.msra.mxu0 %v84
    %236 = vmatpush.msra.mxu0 %v77
    %237 = vmatpush.msra.mxu0 %v70
    %238 = vmatmul.f32.gmra.mxu0 %v140
    %v239 = vpop.f32.mrf.mxu0
    %v240 = vadd.f32 %v128, %v239
    %241 = vdwg.mxu0
    %242 = vmatpush.msra.mxu0 0.0
    %243 = vmatpush.msra.mxu0 0.0
    %244 = vmatpush.msra.mxu0 0.0
    %245 = vmatpush.msra.mxu0 0.0
    %246 = vmatpush.msra.mxu0 0.0
    %247 = vmatpush.msra.mxu0 0.0
    %248 = vmatpush.msra.mxu0 0.0
    %249 = vmatpush.msra.mxu0 0.0
    %250 = vmatpush.msra.mxu0 %v120
    %251 = vmatpush.msra.mxu0 %v113
    %252 = vmatpush.msra.mxu0 %v106
    %253 = vmatpush.msra.mxu0 %v99
    %254 = vmatpush.msra.mxu0 %v92
    %255 = vmatpush.msra.mxu0 %v85
    %256 = vmatpush.msra.mxu0 %v78
    %257 = vmatpush.msra.mxu0 %v71
    %258 = vmatmul.f32.gmra.mxu0 %v140
    %v259 = vpop.f32.mrf.mxu0
    %v260 = vadd.f32 %v129, %v259
    %261 = vdwg.mxu0
    %262 = vmatpush.msra.mxu0 0.0
    %263 = vmatpush.msra.mxu0 0.0
    %264 = vmatpush.msra.mxu0 0.0
    %265 = vmatpush.msra.mxu0 0.0
    %266 = vmatpush.msra.mxu0 0.0
    %267 = vmatpush.msra.mxu0 0.0
    %268 = vmatpush.msra.mxu0 0.0
    %269 = vmatpush.msra.mxu0 0.0
    %270 = vmatpush.msra.mxu0 %v121
    %271 = vmatpush.msra.mxu0 %v114
    %272 = vmatpush.msra.mxu0 %v107
    %273 = vmatpush.msra.mxu0 %v100
    %274 = vmatpush.msra.mxu0 %v93
    %275 = vmatpush.msra.mxu0 %v86
    %276 = vmatpush.msra.mxu0 %v79
    %277 = vmatpush.msra.mxu0 %v72
    %278 = vmatmul.f32.gmra.mxu0 %v140
    %v279 = vpop.f32.mrf.mxu0
    %v280 = vadd.f32 %v130, %v279
    %281 = vdwg.mxu0
    %282 = vst [vmem:[#allocation5] sm:$0xff] %v160
    %283 = vst [vmem:[#allocation5 + $0x8] sm:$0xff] %v180
    %284 = vst [vmem:[#allocation5 + $0x10] sm:$0xff] %v200
    %285 = vst [vmem:[#allocation5 + $0x18] sm:$0xff] %v220
    %286 = vst [vmem:[#allocation5 + $0x20] sm:$0xff] %v240
    %287 = vst [vmem:[#allocation5 + $0x28] sm:$0xff] %v260
    %vm288 = vcmask 130048
    %289 = vst.msk [vmem:[#allocation5 + $0x30] sm:$0xff] %vm288, %v280
    // Predicated region
    $region26: #{tpu_custom_call.1} parent=1 // pred_check
      _
    $region27: #{tpu_custom_call.1} parent=1 // pred_check_branch
      %291 = sbr.rel (0) target = $region29
    $region28: #{tpu_custom_call.1} parent=1 // pred_region
      %293 = vsyncadd [#allocation4], 0
      %s295 = sshll.u32 [#allocation5], 4
      %s296 = int_to_ptr.vmem [resolvable:$true] %s295
      %s297 = sshll.u32 %s5, 4
      %s298 = int_to_ptr.hbm [resolvable:$true] %s297
      %300 = dma.vmem_to_hbm [thread:$0]  %s296, 896, %s298, [#allocation4]
    $region29: #{tpu_custom_call.1} parent=1 // pred_fallthru
      _
    // Predicated region
    $region30: #{tpu_custom_call.1} parent=1 // pred_check
      _
    $region31: #{tpu_custom_call.1} parent=1 // pred_check_branch
      %302 = sbr.rel (0) target = $region33
    $region32: #{tpu_custom_call.1} parent=1 // pred_region
      %304 = dma.done [#allocation4], 896
    $region33: #{tpu_custom_call.1} parent=1 // pred_fallthru
      _
    %305 = vsyncpa [#allocation3], 1
    %306 = vsyncpa [#allocation4], 1

</llo_original>
